<compile_context>
chip_gen: v6e
topology: v6e:2x2x1
jax: 0.10.0
libtpu: 0.0.40
codegen_flags: <defaults>
</compile_context>

<pallas_src>
import math
import functools

import jax
import jax.numpy as jnp
from jax import lax
from jax.experimental import pallas as pl
from jax.experimental.pallas import tpu as pltpu


# ----------------------------------------------------------------------------
# Helpers
# ----------------------------------------------------------------------------
def _choose_tile(dim, preferred, align):
    """Largest tile <= preferred that divides dim and is a multiple of align,
    falling back to the full extent (always legal as a block dim)."""
    if dim <= preferred:
        return dim
    if dim % preferred == 0:
        return preferred
    t = (preferred // align) * align
    while t >= align:
        if dim % t == 0:
            return t
        t -= align
    return dim


def _divisor_at_most(n, cap):
    d = min(n, cap)
    while n % d:
        d -= 1
    return d


@functools.lru_cache(maxsize=None)
def _vmem_limit_bytes():
    """~3/4 of physical VMEM, capped at 96 MiB (v5e/v6e); ~48 MiB on v7x."""
    try:
        cap = int(pltpu.get_tpu_info().vmem_capacity_bytes)
    except Exception:
        cap = 64 * 1024 * 1024  # conservative (v7x-sized) fallback
    return int(min(cap * 3 // 4, 96 * 1024 * 1024))


# ----------------------------------------------------------------------------
# Pallas kernel: tiled dense layer  y = x @ W^T + b  (W stored pre-transposed)
# grid = (M/tm, N/tn, K/tk), f32 accumulator scratch, bias folded into the
# single finalize store.
# ----------------------------------------------------------------------------
def _linear_kernel(x_ref, w_ref, b_ref, o_ref, acc_ref):
    @pl.when(pl.program_id(2) == 0)
    def _():
        acc_ref[...] = jnp.zeros_like(acc_ref)

    acc_ref[...] += jnp.dot(
        x_ref[...], w_ref[...], preferred_element_type=jnp.float32
    )

    @pl.when(pl.program_id(2) == pl.num_programs(2) - 1)
    def _():
        o_ref[...] = (acc_ref[...] + b_ref[...]).astype(o_ref.dtype)


def pallas_linear(x2d, w_t, b, *, tm=512, tn=512, tk=512):
    M, K = x2d.shape
    K2, N = w_t.shape
    assert K == K2
    Tm = _choose_tile(M, tm, 8)
    Tn = _choose_tile(N, tn, 128)
    Tk = _choose_tile(K, tk, 128)
    grid = (M // Tm, N // Tn, K // Tk)
    return pl.pallas_call(
        _linear_kernel,
        out_shape=jax.ShapeDtypeStruct((M, N), x2d.dtype),
        grid_spec=pltpu.PrefetchScalarGridSpec(
            num_scalar_prefetch=0,
            grid=grid,
            in_specs=[
                pl.BlockSpec((Tm, Tk), lambda i, j, k: (i, k)),
                pl.BlockSpec((Tk, Tn), lambda i, j, k: (k, j)),
                pl.BlockSpec((1, Tn), lambda i, j, k: (0, j)),
            ],
            out_specs=pl.BlockSpec((Tm, Tn), lambda i, j, k: (i, j)),
            scratch_shapes=[pltpu.VMEM((Tm, Tn), jnp.float32)],
        ),
        compiler_params=pltpu.CompilerParams(
            dimension_semantics=("parallel", "parallel", "arbitrary"),
            vmem_limit_bytes=_vmem_limit_bytes(),
        ),
    )(x2d, w_t, b.reshape(1, N).astype(jnp.float32))


# ----------------------------------------------------------------------------
# Flash-style attention (fast path).
#
# Operates directly on the 2-D projection layout (B*S, n_cols):
#   q block: (Tq,  Hc) columns [ (q_col0+g)*Hc : ... ]   (Hc = head_group*d_k)
#   k/v    : (Tkv, Hc) analogous (k_col0 / v_col0 allow the fused QKV buffer)
#   out    : (Tq,  Hc) lane-dense block of the (B*Sq, d_model) output
# Inside the kernel a small static Python loop walks the head_group heads;
# m/l/acc live in VMEM scratch and persist across the kv grid axis.
# ----------------------------------------------------------------------------
def _flash_attn_kernel(q_ref, k_ref, v_ref, o_ref, m_sc, l_sc, acc_sc,
                       *, d_k, heads):
    kv = pl.program_id(3)

    @pl.when(kv == 0)
    def _():
        m_sc[...] = jnp.full_like(m_sc, -jnp.inf)
        l_sc[...] = jnp.zeros_like(l_sc)
        acc_sc[...] = jnp.zeros_like(acc_sc)

    for hh in range(heads):
        cs = slice(hh * d_k, (hh + 1) * d_k)
        q_h = q_ref[:, cs]                                   # (Tq,  d_k)
        k_h = k_ref[:, cs]                                   # (Tkv, d_k)
        # q is already scaled by 1/sqrt(d_k) (folded into W_q / b_q).
        s = lax.dot_general(
            q_h, k_h, (((1,), (1,)), ((), ())),
            preferred_element_type=jnp.float32)               # (Tq, Tkv)
        m_prev = m_sc[:, hh:hh + 1]                           # (Tq, 1)
        m_new = jnp.maximum(m_prev, jnp.max(s, axis=-1, keepdims=True))
        alpha = jnp.exp(m_prev - m_new)                       # (Tq, 1)
        p = jnp.exp(s - m_new)                                # (Tq, Tkv) f32
        l_sc[:, hh:hh + 1] = (alpha * l_sc[:, hh:hh + 1]
                              + jnp.sum(p, axis=-1, keepdims=True))
        pv = jnp.dot(p.astype(v_ref.dtype), v_ref[:, cs],
                     preferred_element_type=jnp.float32)      # (Tq, d_k)
        acc_sc[:, cs] = alpha * acc_sc[:, cs] + pv
        m_sc[:, hh:hh + 1] = m_new

    @pl.when(kv == pl.num_programs(3) - 1)
    def _():
        for hh in range(heads):
            cs = slice(hh * d_k, (hh + 1) * d_k)
            inv_l = pl.reciprocal(l_sc[:, hh:hh + 1], approx=True)
            acc_sc[:, cs] = acc_sc[:, cs] * inv_l
        # single lane-dense store of the whole (Tq, head_group*d_k) block
        o_ref[...] = acc_sc[...].astype(o_ref.dtype)


def pallas_flash_attention(q_arr, k_arr, v_arr, *, batch, sq, skv, h, d_k,
                           head_group, q_col0=0, k_col0=0, v_col0=0,
                           tq=512, tkv=512):
    d_model = h * d_k
    Hb = head_group
    Hc = Hb * d_k
    nHB = h // Hb
    Tq = _choose_tile(sq, tq, 8)
    Tkv = _choose_tile(skv, tkv, 8)
    nQ = sq // Tq
    nKV = skv // Tkv
    # (8,128) layout constraint on the row tiles (columns are Hc, which is
    # either a multiple of 128 or the full d_model extent by construction).
    if Tq % 8 != 0:
        assert batch == 1 and nQ == 1, "Sq must be a multiple of 8 when batch > 1"
    if Tkv % 8 != 0:
        assert batch == 1 and nKV == 1, "Sk must be a multiple of 8 when batch > 1"

    grid = (batch, nHB, nQ, nKV)
    kernel = functools.partial(_flash_attn_kernel, d_k=d_k, heads=Hb)
    return pl.pallas_call(
        kernel,
        out_shape=jax.ShapeDtypeStruct((batch * sq, d_model), q_arr.dtype),
        grid_spec=pltpu.PrefetchScalarGridSpec(
            num_scalar_prefetch=0,
            grid=grid,
            in_specs=[
                pl.BlockSpec((Tq, Hc),
                             lambda b, g, qi, ki: (b * nQ + qi, q_col0 + g)),
                pl.BlockSpec((Tkv, Hc),
                             lambda b, g, qi, ki: (b * nKV + ki, k_col0 + g)),
                pl.BlockSpec((Tkv, Hc),
                             lambda b, g, qi, ki: (b * nKV + ki, v_col0 + g)),
            ],
            out_specs=pl.BlockSpec((Tq, Hc),
                                   lambda b, g, qi, ki: (b * nQ + qi, g)),
            scratch_shapes=[
                pltpu.VMEM((Tq, Hb), jnp.float32),   # running max (per head)
                pltpu.VMEM((Tq, Hb), jnp.float32),   # running denom (per head)
                pltpu.VMEM((Tq, Hc), jnp.float32),   # output accumulator
            ],
        ),
        compiler_params=pltpu.CompilerParams(
            dimension_semantics=("parallel", "parallel", "parallel",
                                 "arbitrary"),
            vmem_limit_bytes=_vmem_limit_bytes(),
        ),
    )(q_arr, k_arr, v_arr)


# ----------------------------------------------------------------------------
# Attention with materialized probabilities (opt-in slow path, for self.attn).
# Stored probabilities use an exact divide so rows sum to 1 (torch parity).
# TODO(synk): tile the Sk axis (two-pass flash) before using at long Sk.
# ----------------------------------------------------------------------------
def _attn_probs_kernel(q_ref, k_ref, v_ref, o_ref, p_ref):
    # q is already scaled by 1/sqrt(d_k) (folded into W_q / b_q).
    s = jnp.einsum("bqd,bkd->bqk", q_ref[...], k_ref[...],
                   preferred_element_type=jnp.float32)
    m = jnp.max(s, axis=-1, keepdims=True)
    e = jnp.exp(s - m)
    p = e / jnp.sum(e, axis=-1, keepdims=True)   # exact normalization
    p_ref[...] = p.astype(p_ref.dtype)
    o_ref[...] = jnp.einsum(
        "bqk,bkd->bqd", p.astype(v_ref.dtype), v_ref[...],
        preferred_element_type=jnp.float32).astype(o_ref.dtype)


def pallas_attention_with_probs(q, k, v, *, hb=2, tq=256,
                                attn_dtype=jnp.float32):
    # q, k, v: (B*h, S, d_k)
    BH, Sq, Dk = q.shape
    Sk = k.shape[1]
    Hb = _divisor_at_most(BH, hb)
    Tq = _choose_tile(Sq, tq, 8)
    grid = (BH // Hb, Sq // Tq)
    return pl.pallas_call(
        _attn_probs_kernel,
        out_shape=(
            jax.ShapeDtypeStruct((BH, Sq, Dk), q.dtype),
            jax.ShapeDtypeStruct((BH, Sq, Sk), attn_dtype),
        ),
        grid_spec=pltpu.PrefetchScalarGridSpec(
            num_scalar_prefetch=0,
            grid=grid,
            in_specs=[
                pl.BlockSpec((Hb, Tq, Dk), lambda b, qi: (b, qi, 0)),
                pl.BlockSpec((Hb, Sk, Dk), lambda b, qi: (b, 0, 0)),
                pl.BlockSpec((Hb, Sk, Dk), lambda b, qi: (b, 0, 0)),
            ],
            out_specs=(
                pl.BlockSpec((Hb, Tq, Dk), lambda b, qi: (b, qi, 0)),
                pl.BlockSpec((Hb, Tq, Sk), lambda b, qi: (b, qi, 0)),
            ),
        ),
        compiler_params=pltpu.CompilerParams(
            dimension_semantics=("parallel", "parallel"),
            vmem_limit_bytes=_vmem_limit_bytes(),
        ),
    )(q, k, v)


# ----------------------------------------------------------------------------
# Module wrapper
# ----------------------------------------------------------------------------
class MultiHeadedAttention:
    def __init__(self, h, d_model, key, dropout=0.1,
                 compute_dtype=jnp.bfloat16, store_attn=False):
        assert d_model % h == 0
        self.h = h
        self.d_k = d_model // h
        self.d_model = d_model
        self.scale_num = 1.0 / math.sqrt(self.d_k)
        self.compute_dtype = compute_dtype
        self.store_attn = store_attn

        # 4 Linear(d_model, d_model) layers, PyTorch-style uniform init.
        bound = 1.0 / math.sqrt(d_model)
        keys = jax.random.split(key, 8)
        w_f32, b_f32 = [], []
        for li in range(4):
            w_f32.append(jax.random.uniform(
                keys[2 * li], (d_model, d_model), jnp.float32, -bound, bound))
            b_f32.append(jax.random.uniform(
                keys[2 * li + 1], (d_model,), jnp.float32, -bound, bound))
        # Unfolded f32 copies, kept only so the pure-JAX reference is an
        # independent check of the kernel path.
        self._ref_weights = w_f32
        self._ref_biases = b_f32

        # Kernel parameters: scale folded into W_q/b_q BEFORE the compute-dtype
        # cast; weights stored pre-transposed as (d_in, d_out).
        self.weights_t, self.biases = [], []
        for li in range(4):
            w, b = w_f32[li], b_f32[li]
            if li == 0:
                w = w * self.scale_num
                b = b * self.scale_num
            self.weights_t.append(w.T.astype(compute_dtype))
            self.biases.append(b)                       # biases stay f32
        # Fused QKV weights: self-attention fast path reads x from HBM once.
        self.w_qkv_t = jnp.concatenate(self.weights_t[:3], axis=1)
        self.b_qkv = jnp.concatenate(self.biases[:3], axis=0)

        # Minimum head group whose combined width is a multiple of 128 lanes.
        g = 128 // math.gcd(self.d_k, 128)
        self.head_group = g if (g <= h and h % g == 0) else h

        self.attn = None
        # TODO(synk): dropout on attention probabilities is treated as
        # eval-mode identity (no RNG dropout inside the kernels).

    def __call__(self, query, key_in, value, mask=None):
        if mask is not None:
            # TODO(synk): boolean mask path (masked_fill with -1e9) not implemented.
            raise NotImplementedError("mask is not supported in the Pallas path")
        cdt = self.compute_dtype
        B, Sq, _ = query.shape
        Sk = key_in.shape[1]
        d = self.d_model
        Hb = self.head_group
        Hc = Hb * self.d_k

        self_attention = (query is key_in) and (key_in is value)
        # The fused-QKV buffer can only be read directly by the attention
        # kernel when the head-group width is a multiple of 128 lanes.
        fused = self_attention and (d % 128 == 0)

        if fused:
            qkv = pallas_linear(query.astype(cdt).reshape(-1, d),
                                self.w_qkv_t, self.b_qkv)
            q_arr = k_arr = v_arr = qkv
            cblk = d // Hc                      # column-block offset of one d_model
            q_c0, k_c0, v_c0 = 0, cblk, 2 * cblk
            Skv = Sq
        else:
            q_arr = pallas_linear(query.astype(cdt).reshape(-1, d),
                                  self.weights_t[0], self.biases[0])
            k_arr = pallas_linear(key_in.astype(cdt).reshape(-1, d),
                                  self.weights_t[1], self.biases[1])
            v_arr = pallas_linear(value.astype(cdt).reshape(-1, d),
                                  self.weights_t[2], self.biases[2])
            q_c0 = k_c0 = v_c0 = 0
            Skv = Sk

        if self.store_attn:
            # Slow, opt-in parity path: materialize p_attn (self.attn).
            def split_heads(arr2d, col0, s):
                y = arr2d[:, col0 * Hc: col0 * Hc + d]
                y = y.reshape(B, s, self.h, self.d_k)
                return jnp.transpose(y, (0, 2, 1, 3)).reshape(
                    B * self.h, s, self.d_k)

            q3 = split_heads(q_arr, q_c0, Sq)
            k3 = split_heads(k_arr, k_c0, Skv)
            v3 = split_heads(v_arr, v_c0, Skv)
            x3, p_attn = pallas_attention_with_probs(q3, k3, v3)
            self.attn = p_attn.reshape(B, self.h, Sq, Skv)
            x2d = (x3.reshape(B, self.h, Sq, self.d_k)
                     .transpose(0, 2, 1, 3).reshape(B * Sq, d))
        else:
            self.attn = None
            # Fast path: flash attention reading/writing the 2-D (rows, cols)
            # projection layout directly -- no split/merge transposes.
            x2d = pallas_flash_attention(
                q_arr, k_arr, v_arr,
                batch=B, sq=Sq, skv=Skv, h=self.h, d_k=self.d_k,
                head_group=Hb, q_col0=q_c0, k_col0=k_c0, v_col0=v_c0)

        out = pallas_linear(x2d, self.weights_t[3], self.biases[3])
        return out.reshape(B, Sq, d).astype(jnp.float32)


# ----------------------------------------------------------------------------
# Pure-JAX reference (uses the unfolded f32 weights) for sanity checks
# ----------------------------------------------------------------------------
def reference_forward(mha, query, key_in, value, return_probs=False):
    def lin(x, i):
        return x @ mha._ref_weights[i].T + mha._ref_biases[i]

    B, Sq, D = query.shape
    h, dk = mha.h, mha.d_k
    q = lin(query, 0).reshape(B, Sq, h, dk).transpose(0, 2, 1, 3)
    k = lin(key_in, 1).reshape(B, -1, h, dk).transpose(0, 2, 1, 3)
    v = lin(value, 2).reshape(B, -1, h, dk).transpose(0, 2, 1, 3)
    scores = jnp.einsum("bhqd,bhkd->bhqk", q, k) * mha.scale_num
    p = jax.nn.softmax(scores, axis=-1)
    x = jnp.einsum("bhqk,bhkd->bhqd", p, v)
    x = x.transpose(0, 2, 1, 3).reshape(B, Sq, D)
    out = lin(x, 3)
    return (out, p) if return_probs else out


if __name__ == "__main__":
    root = jax.random.PRNGKey(0)
    kp, kq, kk, kv, kp2, kx2 = jax.random.split(root, 6)

    # ---- small config, f32 compute (tight numerics) ----
    B, S, H, D_MODEL = 2, 8, 4, 32
    query = jax.random.normal(kq, (B, S, D_MODEL), jnp.float32)
    key_in = jax.random.normal(kk, (B, S, D_MODEL), jnp.float32)
    value = jax.random.normal(kv, (B, S, D_MODEL), jnp.float32)

    mha = MultiHeadedAttention(H, D_MODEL, kp, compute_dtype=jnp.float32)

    # 1) cross-attention inputs: separate projections + flash fast path.
    out = jax.block_until_ready(mha(query, key_in, value, mask=None))
    ref = reference_forward(mha, query, key_in, value)
    assert out.shape == (B, S, D_MODEL)
    assert jnp.allclose(out, ref, atol=2e-3, rtol=2e-3)

    # 2) self-attention (d_model % 128 != 0 -> separate-projection fallback).
    out_self = jax.block_until_ready(mha(query, query, query, mask=None))
    ref_self = reference_forward(mha, query, query, query)
    assert jnp.allclose(out_self, ref_self, atol=2e-3, rtol=2e-3)

    # 3) opt-in path that materializes attention probabilities (self.attn).
    mha_p = MultiHeadedAttention(H, D_MODEL, kp, compute_dtype=jnp.float32,
                                 store_attn=True)
    out_p = jax.block_until_ready(mha_p(query, key_in, value, mask=None))
    ref_out_p, ref_p = reference_forward(mha_p, query, key_in, value,
                                         return_probs=True)
    assert jnp.allclose(out_p, ref_out_p, atol=2e-3, rtol=2e-3)
    assert jnp.allclose(mha_p.attn, ref_p, atol=2e-3, rtol=2e-3)

    # ---- larger config, default bf16 compute: fused QKV path, column-offset
    #      index_maps, multi-step grids on every axis ----
    B2, S2, H2, D2 = 2, 1024, 2, 128
    x2 = jax.random.normal(kx2, (B2, S2, D2), jnp.float32)
    mha2 = MultiHeadedAttention(H2, D2, kp2)  # bf16 default compute dtype
    out2 = jax.block_until_ready(mha2(x2, x2, x2, mask=None))
    ref2 = reference_forward(mha2, x2, x2, x2)
    assert out2.shape == (B2, S2, D2)
    rel = jnp.linalg.norm(out2 - ref2) / jnp.linalg.norm(ref2)
    assert rel < 5e-2, f"bf16 path relative error too large: {rel}"

    print("KERNEL_OK")
</pallas_src>

<mosaic_0001>
module attributes {stable_mosaic.version = 11 : i64} {
  func.func @_linear_kernel(%arg0: i32, %arg1: i32, %arg2: i32, %arg3: memref<16x32xf32, #tpu.memory_space<vmem>>, %arg4: memref<32x32xf32, #tpu.memory_space<vmem>>, %arg5: memref<1x32xf32, #tpu.memory_space<vmem>>, %arg6: memref<16x32xf32, #tpu.memory_space<vmem>>, %arg7: memref<16x32xf32, #tpu.memory_space<vmem>>) attributes {dimension_semantics = [#tpu.dimension_semantics<parallel>, #tpu.dimension_semantics<parallel>, #tpu.dimension_semantics<arbitrary>], iteration_bounds = array<i64: 1, 1, 1>, scalar_prefetch = 0 : i64, scratch_operands = 1 : i64, tpu.core_type = #tpu.core_type<tc>, window_params = [{transform_indices = @transform_0, window_bounds = array<i64: 16, 32>}, {transform_indices = @transform_1, window_bounds = array<i64: 32, 32>}, {transform_indices = @transform_2, window_bounds = array<i64: 1, 32>}, {transform_indices = @transform_3, window_bounds = array<i64: 16, 32>}]} {
    %c0_i32 = arith.constant 0 : i32
    %0 = arith.cmpi eq, %arg2, %c0_i32 : i32
    %1 = arith.extui %0 : i1 to i32
    %c0_i32_0 = arith.constant 0 : i32
    %2 = arith.cmpi ne, %1, %c0_i32_0 : i32
    scf.if %2 {
      %cst_10 = arith.constant 0.000000e+00 : f32
      %12 = vector.broadcast %cst_10 : f32 to vector<16x32xf32>
      %c0_11 = arith.constant 0 : index
      %c0_12 = arith.constant 0 : index
      %13 = vector.load %arg7[%c0_11, %c0_12] : memref<16x32xf32, #tpu.memory_space<vmem>>, vector<16x32xf32>
      tpu.vector_store %arg7[%c0_11, %c0_12], %12 {strides = array<i32>} : memref<16x32xf32, #tpu.memory_space<vmem>>, vector<16x32xf32>,
    } else {
    }
    %c0 = arith.constant 0 : index
    %c0_1 = arith.constant 0 : index
    %3 = vector.load %arg7[%c0, %c0_1] : memref<16x32xf32, #tpu.memory_space<vmem>>, vector<16x32xf32>
    %c0_2 = arith.constant 0 : index
    %c0_3 = arith.constant 0 : index
    %4 = vector.load %arg3[%c0_2, %c0_3] : memref<16x32xf32, #tpu.memory_space<vmem>>, vector<16x32xf32>
    %c0_4 = arith.constant 0 : index
    %c0_5 = arith.constant 0 : index
    %5 = vector.load %arg4[%c0_4, %c0_5] : memref<32x32xf32, #tpu.memory_space<vmem>>, vector<32x32xf32>
    %cst = arith.constant dense<0.000000e+00> : vector<16x32xf32>
    %6 = tpu.matmul %4, %5, %cst {dimension_numbers = #tpu.dot_dimension_numbers<[1], [0], [0], [1], [0, 0, 1, 1], [], []>} : vector<16x32xf32>, vector<32x32xf32>, vector<16x32xf32> -> vector<16x32xf32>
    %7 = arith.addf %3, %6 : vector<16x32xf32>
    %c0_6 = arith.constant 0 : index
    %c0_7 = arith.constant 0 : index
    %8 = vector.load %arg7[%c0_6, %c0_7] : memref<16x32xf32, #tpu.memory_space<vmem>>, vector<16x32xf32>
    tpu.vector_store %arg7[%c0_6, %c0_7], %7 {strides = array<i32>} : memref<16x32xf32, #tpu.memory_space<vmem>>, vector<16x32xf32>,
    %c0_i32_8 = arith.constant 0 : i32
    %9 = arith.cmpi eq, %arg2, %c0_i32_8 : i32
    %10 = arith.extui %9 : i1 to i32
    %c0_i32_9 = arith.constant 0 : i32
    %11 = arith.cmpi ne, %10, %c0_i32_9 : i32
    scf.if %11 {
      %c0_10 = arith.constant 0 : index
      %c0_11 = arith.constant 0 : index
      %12 = vector.load %arg7[%c0_10, %c0_11] : memref<16x32xf32, #tpu.memory_space<vmem>>, vector<16x32xf32>
      %c0_12 = arith.constant 0 : index
      %c0_13 = arith.constant 0 : index
      %13 = vector.load %arg5[%c0_12, %c0_13] : memref<1x32xf32, #tpu.memory_space<vmem>>, vector<1x32xf32>
      %14 = vector.broadcast %13 : vector<1x32xf32> to vector<16x32xf32>
      %15 = arith.addf %12, %14 : vector<16x32xf32>
      %c0_14 = arith.constant 0 : index
      %c0_15 = arith.constant 0 : index
      %16 = vector.load %arg6[%c0_14, %c0_15] : memref<16x32xf32, #tpu.memory_space<vmem>>, vector<16x32xf32>
      tpu.vector_store %arg6[%c0_14, %c0_15], %15 {strides = array<i32>} : memref<16x32xf32, #tpu.memory_space<vmem>>, vector<16x32xf32>,
    } else {
    }
    return
  }
  func.func @transform_0(%arg0: i32, %arg1: i32, %arg2: i32) -> (i32, i32) {
    %c0_i32 = arith.constant 0 : i32
    return %arg0, %arg2 : i32, i32
  }
  func.func @transform_1(%arg0: i32, %arg1: i32, %arg2: i32) -> (i32, i32) {
    %c0_i32 = arith.constant 0 : i32
    return %arg2, %arg1 : i32, i32
  }
  func.func @transform_2(%arg0: i32, %arg1: i32, %arg2: i32) -> (i32, i32) {
    %c0_i32 = arith.constant 0 : i32
    %c0_i32_0 = arith.constant 0 : i32
    return %c0_i32, %arg1 : i32, i32
  }
  func.func @transform_3(%arg0: i32, %arg1: i32, %arg2: i32) -> (i32, i32) {
    %c0_i32 = arith.constant 0 : i32
    return %arg0, %arg1 : i32, i32
  }
}

</mosaic_0001>

<llo_original>
// kernel: tpu_custom_call.1
$region0: #{tpu_custom_call.1}
  #allocation0 [shape = 'u32[]', space=smem, size = 0x4, offset = 0x4, fixed_abs, tag = 'smem constant byte address 0x4 - core index']
  #allocation1 [shape = 'u32[144,128]{1,0:T(1,128)}', space=vmem, size = 0x12000, scoped, tag = 'internal scratch']
  #allocation2 [shape = 'f32[16,32]{1,0:T(8,128)}', space=vmem, size = 0x2000, scoped, tag = 'scratch operand']
  %s0 = inlined_call_operand.hbm [shape: f32[16,32], index: 0, kind: input, shape index: {}]
  %s1 = inlined_call_operand.hbm [shape: f32[32,32], index: 1, kind: input, shape index: {}]
  %s2 = inlined_call_operand.vmem [shape: f32[1,32], index: 2, kind: input, shape index: {}]
  %s3 = inlined_call_operand.hbm [shape: f32[16,32], index: 3, kind: output, shape index: {}]
  %s4 = sld [smem:[#allocation0]]
  $region38: #{tpu_custom_call.1} parent=0
    _
  %s6 = ssub.s32 1, %s4
  %s7 = scalar_select 0, %s6, %s4
  $region1: #{tpu_custom_call.1} parent=0
    #allocation3 [shape = 'u8[8192]{0}', space=vmem, size = 0x2000, scoped, tag = 'input window, operand 0, single buffered']
    #allocation4 [shape = 's32[1]{0}', space=sflag, size = 0x4, scoped, tag = 'scoped memory for tpu_custom_call.1']
    #allocation5 [shape = 's32[1]{0}', space=sflag, size = 0x4, scoped, tag = 'scoped memory for tpu_custom_call.1']
    #allocation6 [shape = 'u8[16384]{0}', space=vmem, size = 0x4000, scoped, tag = 'input window, operand 1, single buffered']
    #allocation7 [shape = 's32[1]{0}', space=sflag, size = 0x4, scoped, tag = 'scoped memory for tpu_custom_call.1']
    #allocation8 [shape = 'u8[8192]{0}', space=vmem, size = 0x2000, scoped, tag = 'output window, operand 0, single buffered']
    %8 = vsyncpa [#allocation4], 0
    %9 = vsyncpa [#allocation7], 0
    %10 = vsyncpa [#allocation5], 0
    // Predicated region
    $region2: #{tpu_custom_call.1} parent=1 // pred_check
      _
    $region3: #{tpu_custom_call.1} parent=1 // pred_check_branch
      %12 = sbr.rel (0) target = $region5
    $region4: #{tpu_custom_call.1} parent=1 // pred_region
      %s14 = ssub.s32 256, 256
      %15 = vsyncadd [#allocation4], %s14
      %s16 = sshll.u32 [#allocation3], 4
      %s17 = int_to_ptr.vmem [resolvable:$true] %s16
      %22 = dma.hbm_to_vmem [thread:$0]  %s0, 256, %s17, [#allocation4], 128, 128, 8
    $region5: #{tpu_custom_call.1} parent=1 // pred_fallthru
      _
    // Predicated region
    $region6: #{tpu_custom_call.1} parent=1 // pred_check
      _
    $region7: #{tpu_custom_call.1} parent=1 // pred_check_branch
      %24 = sbr.rel (0) target = $region9
    $region8: #{tpu_custom_call.1} parent=1 // pred_region
      %s26 = ssub.s32 512, 512
      %27 = vsyncadd [#allocation7], %s26
      %s28 = sshll.u32 [#allocation6], 4
      %s29 = int_to_ptr.vmem [resolvable:$true] %s28
      %34 = dma.hbm_to_vmem [thread:$0]  %s1, 512, %s29, [#allocation7], 128, 128, 8
    $region9: #{tpu_custom_call.1} parent=1 // pred_fallthru
      _
    // Predicated region
    $region10: #{tpu_custom_call.1} parent=1 // pred_check
      _
    $region11: #{tpu_custom_call.1} parent=1 // pred_check_branch
      %36 = sbr.rel (0) target = $region13
    $region12: #{tpu_custom_call.1} parent=1 // pred_region
      _
    $region13: #{tpu_custom_call.1} parent=1 // pred_fallthru
      _
    // Predicated region
    $region14: #{tpu_custom_call.1} parent=1 // pred_check
      _
    $region15: #{tpu_custom_call.1} parent=1 // pred_check_branch
      %38 = sbr.rel (0) target = $region17
    $region16: #{tpu_custom_call.1} parent=1 // pred_region
      %39 = dma.done [#allocation4], 256
    $region17: #{tpu_custom_call.1} parent=1 // pred_fallthru
      _
    // Predicated region
    $region18: #{tpu_custom_call.1} parent=1 // pred_check
      _
    $region19: #{tpu_custom_call.1} parent=1 // pred_check_branch
      %41 = sbr.rel (0) target = $region21
    $region20: #{tpu_custom_call.1} parent=1 // pred_region
      %42 = dma.done [#allocation7], 512
    $region21: #{tpu_custom_call.1} parent=1 // pred_fallthru
      _
    %p43 = scmp.eq.s32.totalorder 0, 0
    // Predicated region
    $region22: #{tpu_custom_call.1} parent=1 // pred_check
      %p44 = pneg %p43
    $region23: #{tpu_custom_call.1} parent=1 // pred_check_branch
      %46 = sbr.rel (%p44) target = $region25
    $region24: #{tpu_custom_call.1} parent=1 // pred_region
      %vm47 = vcmask 261120
      %48 = vst.msk [vmem:[#allocation2] sm:$0xff] %vm47, 0.0
      %49 = vst.msk [vmem:[#allocation2 + $0x8] sm:$0xff] %vm47, 0.0
    $region25: #{tpu_custom_call.1} parent=1 // pred_fallthru
      _
    %v50 = vld [vmem:[#allocation2] sm:$0xff]
    %v51 = vld [vmem:[#allocation2 + $0x8] sm:$0xff]
    %v52 = vld [vmem:[#allocation3] sm:$0xff]
    %v53 = vld [vmem:[#allocation3 + $0x8] sm:$0xff]
    %v54 = vld [vmem:[#allocation6] sm:$0xff]
    %v55 = vld [vmem:[#allocation6 + $0x8] sm:$0xff]
    %v56 = vld [vmem:[#allocation6 + $0x10] sm:$0xff]
    %v57 = vld [vmem:[#allocation6 + $0x18] sm:$0xff]
    %vm58 = vcmask 261120
    %v60 = vsel %vm58, %v52, 0
    %v63 = vsel %vm58, %v53, 0
    %65 = vmatprep.subr.mxu0 0.0
    %66 = vmatpush1.msra.mxu0 0.0
    %67 = vmatprep.subr.mxu0 0.0
    %68 = vmatpush1.msra.mxu0 0.0
    %69 = vmatprep.subr.mxu0 0.0
    %70 = vmatpush1.msra.mxu0 0.0
    %71 = vmatprep.subr.mxu0 0.0
    %72 = vmatpush1.msra.mxu0 0.0
    %73 = vmatprep.subr.mxu0 0.0
    %74 = vmatpush1.msra.mxu0 0.0
    %75 = vmatprep.subr.mxu0 0.0
    %76 = vmatpush1.msra.mxu0 0.0
    %77 = vmatprep.subr.mxu0 0.0
    %78 = vmatpush1.msra.mxu0 0.0
    %79 = vmatprep.subr.mxu0 0.0
    %80 = vmatpush1.msra.mxu0 0.0
    %81 = vmatprep.subr.mxu0 0.0
    %82 = vmatpush1.msra.mxu0 0.0
    %83 = vmatprep.subr.mxu0 0.0
    %84 = vmatpush1.msra.mxu0 0.0
    %85 = vmatprep.subr.mxu0 0.0
    %86 = vmatpush1.msra.mxu0 0.0
    %87 = vmatprep.subr.mxu0 0.0
    %88 = vmatpush1.msra.mxu0 0.0
    %89 = vmatprep.subr.mxu0 0.0
    %90 = vmatpush1.msra.mxu0 %v57
    %91 = vmatprep.subr.mxu0 0.0
    %92 = vmatpush1.msra.mxu0 %v56
    %93 = vmatprep.subr.mxu0 0.0
    %94 = vmatpush1.msra.mxu0 %v55
    %95 = vmatprep.subr.mxu0 0.0
    %96 = vmatpush1.msra.mxu0 %v54
    %97 = vmatprep.subr.mxu0 0.0
    %98 = vmatpush2.msra.mxu0 0.0
    %99 = vmatprep.subr.mxu0 0.0
    %100 = vmatpush2.msra.mxu0 0.0
    %101 = vmatprep.subr.mxu0 0.0
    %102 = vmatpush2.msra.mxu0 0.0
    %103 = vmatprep.subr.mxu0 0.0
    %104 = vmatpush2.msra.mxu0 0.0
    %105 = vmatprep.subr.mxu0 0.0
    %106 = vmatpush2.msra.mxu0 0.0
    %107 = vmatprep.subr.mxu0 0.0
    %108 = vmatpush2.msra.mxu0 0.0
    %109 = vmatprep.subr.mxu0 0.0
    %110 = vmatpush2.msra.mxu0 0.0
    %111 = vmatprep.subr.mxu0 0.0
    %112 = vmatpush2.msra.mxu0 0.0
    %113 = vmatprep.subr.mxu0 0.0
    %114 = vmatpush2.msra.mxu0 0.0
    %115 = vmatprep.subr.mxu0 0.0
    %116 = vmatpush2.msra.mxu0 0.0
    %117 = vmatprep.subr.mxu0 0.0
    %118 = vmatpush2.msra.mxu0 0.0
    %119 = vmatprep.subr.mxu0 0.0
    %120 = vmatpush2.msra.mxu0 0.0
    %121 = vmatprep.subr.mxu0 0.0
    %122 = vmatpush2.msra.mxu0 0.0
    %123 = vmatprep.subr.mxu0 0.0
    %124 = vmatpush2.msra.mxu0 0.0
    %125 = vmatprep.subr.mxu0 0.0
    %126 = vmatpush2.msra.mxu0 0.0
    %127 = vmatprep.subr.mxu0 0.0
    %128 = vmatpush2.msra.mxu0 0.0
    %129 = vmatprep.mubr.f32.mxu0 0.0
    %130 = vmatmul.mubr.f32.gmra.mxu0 %v60
    %v131 = vpop.f32.mrf.mxu0
    %v132 = vadd.f32 0.0, %v131
    %v133 = vpop.f32.mrf.mxu0
    %134 = vmatprep.mubr.f32.mxu0 0.0
    %135 = vmatmul.mubr.f32.gmra.mxu0 %v63
    %v136 = vpop.f32.mrf.mxu0
    %v137 = vadd.f32 0.0, %v136
    %v138 = vpop.f32.mrf.mxu0
    %139 = vdwg.mxu0
    %v140 = vadd.f32 %v50, %v132
    %v141 = vadd.f32 %v51, %v137
    %142 = vst.msk [vmem:[#allocation2] sm:$0xff] %vm58, %v140
    %143 = vst.msk [vmem:[#allocation2 + $0x8] sm:$0xff] %vm58, %v141
    // Predicated region
    $region26: #{tpu_custom_call.1} parent=1 // pred_check
      %p144 = pneg %p43
    $region27: #{tpu_custom_call.1} parent=1 // pred_check_branch
      %146 = sbr.rel (%p144) target = $region29
    $region28: #{tpu_custom_call.1} parent=1 // pred_region
      %v147 = vld [vmem:[#allocation2] sm:$0xff]
      %v148 = vld [vmem:[#allocation2 + $0x8] sm:$0xff]
      %v149 = vld [vmem:[%s2] sm:$0x1]
      %v151 = vlaneseq
      %v152 = vshrl.u32 %v151, 7
      %v153 = vsub.s32 0, %v152
      %v154 = vrot.slane %v149, %v153
      %v156 = vadd.f32 %v147, %v154
      %v157 = vadd.f32 %v148, %v154
      %158 = vst.msk [vmem:[#allocation8] sm:$0xff] %vm58, %v156
      %159 = vst.msk [vmem:[#allocation8 + $0x8] sm:$0xff] %vm58, %v157
    $region29: #{tpu_custom_call.1} parent=1 // pred_fallthru
      _
    // Predicated region
    $region30: #{tpu_custom_call.1} parent=1 // pred_check
      _
    $region31: #{tpu_custom_call.1} parent=1 // pred_check_branch
      %161 = sbr.rel (0) target = $region33
    $region32: #{tpu_custom_call.1} parent=1 // pred_region
      %s163 = ssub.s32 256, 256
      %164 = vsyncadd [#allocation5], %s163
      %s165 = sshll.u32 [#allocation8], 4
      %s166 = int_to_ptr.vmem [resolvable:$true] %s165
      %171 = dma.vmem_to_hbm [thread:$0]  %s166, 256, %s3, [#allocation5], 128, 128, 8
    $region33: #{tpu_custom_call.1} parent=1 // pred_fallthru
      _
    // Predicated region
    $region34: #{tpu_custom_call.1} parent=1 // pred_check
      _
    $region35: #{tpu_custom_call.1} parent=1 // pred_check_branch
      %173 = sbr.rel (0) target = $region37
    $region36: #{tpu_custom_call.1} parent=1 // pred_region
      %174 = dma.done [#allocation5], 256
    $region37: #{tpu_custom_call.1} parent=1 // pred_fallthru
      _
    %175 = vsyncpa [#allocation4], 1
    %176 = vsyncpa [#allocation7], 1
    %177 = vsyncpa [#allocation5], 1

</llo_original>
